<compile_context>
chip_gen: v6e
topology: v6e:2x2x1
jax: 0.10.0
libtpu: 0.0.40
codegen_flags: <defaults>
</compile_context>

<pallas_src>
import functools

import jax
import jax.numpy as jnp
from jax.experimental import pallas as pl
from jax.experimental.pallas import tpu as pltpu

_LANES = 128


def _leaky_relu_kernel(x_ref, o_ref, *, negative_slope, use_max):
    x = x_ref[...]
    slope = jnp.asarray(negative_slope, x.dtype)  # floating dtypes only
    if use_max:
        # For 0 <= slope <= 1: max(x, x*slope) == clamp(min=0) + clamp(max=0)*slope
        o_ref[...] = jnp.maximum(x, x * slope)
    else:
        o_ref[...] = jnp.where(x > 0, x, x * slope)


def _sublane_multiple(dtype):
    # Sub-32-bit dtypes pack along sublanes: 8 rows (f32), 16 (bf16), 32 (int8).
    itemsize = jnp.dtype(dtype).itemsize
    return 8 * max(1, 4 // max(1, itemsize))


def _round_up(v, m):
    return ((v + m - 1) // m) * m


@functools.lru_cache(maxsize=1)
def _tpu_config():
    """(target_block_bytes, vmem_limit_bytes, min_grid_steps) per TPU generation."""
    target = 2 * 1024 * 1024          # v5e / unknown: 2 MiB blocks
    vmem_limit = 32 * 1024 * 1024
    min_grid = 1
    try:
        kind = jax.devices()[0].device_kind.lower()
    except Exception:  # pragma: no cover - defensive; keep conservative defaults
        kind = ""
    if "v7" in kind or "7x" in kind:
        # v7x: 3.2 TB/s HBM -> bigger blocks amortize the ~0.35us grid-step
        # overhead; 64 MiB physical VMEM -> 48 MiB scoped limit. Double-buffered
        # in+out at 6 MiB/block is ~24 MiB, well under the limit.
        target = 6 * 1024 * 1024
        vmem_limit = 48 * 1024 * 1024
        min_grid = 2                  # 2 TensorCores/chip: keep both busy.
    elif "v6" in kind:
        # v6e: ~4 MiB blocks measured ~86% of HBM roofline; 128 MiB physical VMEM.
        target = 4 * 1024 * 1024
        vmem_limit = 32 * 1024 * 1024
    return target, vmem_limit, min_grid


def _run_2d(x2d, negative_slope, donate=False):
    """Run the elementwise kernel on a lane-dense (rows, 128) slab."""
    rows, lanes = x2d.shape
    dtype = x2d.dtype
    itemsize = jnp.dtype(dtype).itemsize
    sub = _sublane_multiple(dtype)
    target_bytes, vmem_limit, min_grid = _tpu_config()

    rows_up = _round_up(rows, sub)
    target_rows = max(sub, (target_bytes // (lanes * itemsize)) // sub * sub)

    if rows_up >= 2 * sub:
        # Split into ~target-sized blocks; at least `min_grid` steps so both
        # TensorCores get work on v7x, split evenly so the masked edge block is
        # never mostly padding.
        num_blocks = max(min_grid, pl.cdiv(rows_up, target_rows))
        tile_rows = min(_round_up(pl.cdiv(rows_up, num_blocks), sub), rows_up)
    else:
        tile_rows = rows_up

    grid = (pl.cdiv(rows, tile_rows),)  # partial edge block handled by Pallas masking
    use_max = 0.0 <= float(negative_slope) <= 1.0
    kernel = functools.partial(
        _leaky_relu_kernel,
        negative_slope=float(negative_slope),
        use_max=use_max,
    )

    n = rows * lanes
    return pl.pallas_call(
        kernel,
        out_shape=jax.ShapeDtypeStruct((rows, lanes), dtype),
        grid_spec=pltpu.PrefetchScalarGridSpec(
            num_scalar_prefetch=0,
            grid=grid,
            in_specs=[pl.BlockSpec((tile_rows, lanes), lambda i: (i, 0))],
            out_specs=pl.BlockSpec((tile_rows, lanes), lambda i: (i, 0)),
        ),
        compiler_params=pltpu.CompilerParams(
            dimension_semantics=("parallel",),   # megacore sharding on v7x
            vmem_limit_bytes=vmem_limit,
        ),
        cost_estimate=pl.CostEstimate(
            flops=2 * n, transcendentals=0, bytes_accessed=2 * n * itemsize),
        # Only alias when the caller explicitly donates x (avoids hidden copies).
        input_output_aliases=({0: 0} if donate else {}),
    )(x2d)


def leaky_relu_alpha(x, negative_slope, donate=False):
    """Elementwise LeakyReLU forward; accepts any-shape input (e.g. NCHW)."""
    n = x.size
    if n == 0:
        return x

    if (not jnp.issubdtype(x.dtype, jnp.floating)) or (n % _LANES != 0):
        # Ragged sizes / non-float dtypes: this op is pure HBM streaming, so a
        # plain fused XLA expression is as fast as a kernel and avoids the old
        # pad + slice path that tripled HBM traffic.
        slope = negative_slope
        return jnp.maximum(x, 0) + jnp.minimum(x, 0) * slope

    # Common path: free contiguous reshape to a lane-dense (rows, 128) slab.
    orig_shape = x.shape
    out2d = _run_2d(x.reshape(n // _LANES, _LANES), negative_slope, donate=donate)
    return out2d.reshape(orig_shape)


class LeakyReLUAlpha:
    """JAX/Pallas equivalent of the PyTorch LeakyReLUAlpha module (forward only)."""

    def __init__(self, negative_slope, alpha=None):
        self.negative_slope = float(negative_slope)
        # alpha only matters for the custom backward at x == 0; kept for fidelity.
        # TODO(synk): custom backward (alpha-weighted subgradient at x == 0) not
        # implemented; forward-only per task.
        self.alpha = self.negative_slope if alpha is None else float(alpha)

    def __call__(self, x):
        return leaky_relu_alpha(x, self.negative_slope)


if __name__ == "__main__":
    key = jax.random.PRNGKey(0)
    # Small NCHW input consistent with the module's usual usage.
    x = jax.random.normal(key, (2, 4, 16, 16), dtype=jnp.float32)

    module = LeakyReLUAlpha(negative_slope=0.1)  # alpha defaults to negative_slope
    out = jax.block_until_ready(module(x))

    # Reference check against the pure-JAX forward (clamp form).
    ref = jnp.maximum(x, 0) + jnp.minimum(x, 0) * 0.1
    assert out.shape == x.shape and out.dtype == x.dtype
    assert jnp.allclose(out, ref, atol=1e-6, rtol=1e-6)

    # bf16 path (exercises sublane multiple 16 and in-dtype slope).
    x_bf16 = x.astype(jnp.bfloat16)
    out_b = jax.block_until_ready(module(x_bf16))
    ref_b = jnp.maximum(x_bf16, 0) + jnp.minimum(x_bf16, 0) * jnp.asarray(0.1, jnp.bfloat16)
    assert out_b.dtype == jnp.bfloat16
    assert jnp.allclose(out_b.astype(jnp.float32), ref_b.astype(jnp.float32),
                        atol=1e-2, rtol=1e-2)

    # Ragged fallback (size not a multiple of 128) -> fused plain-JAX path.
    x_ragged = jax.random.normal(key, (3, 5, 7), dtype=jnp.float32)
    out_r = jax.block_until_ready(module(x_ragged))
    ref_r = jnp.maximum(x_ragged, 0) + jnp.minimum(x_ragged, 0) * 0.1
    assert jnp.allclose(out_r, ref_r, atol=1e-6, rtol=1e-6)

    print("KERNEL_OK")
</pallas_src>

<mosaic_0001>
module attributes {stable_mosaic.version = 11 : i64} {
  func.func @_leaky_relu_kernel(%arg0: i32, %arg1: memref<16x128xf32, #tpu.memory_space<vmem>>, %arg2: memref<16x128xf32, #tpu.memory_space<vmem>>) attributes {dimension_semantics = [#tpu.dimension_semantics<parallel>], iteration_bounds = array<i64: 1>, scalar_prefetch = 0 : i64, scratch_operands = 0 : i64, tpu.core_type = #tpu.core_type<tc>, window_params = [{transform_indices = @transform_0, window_bounds = array<i64: 16, 128>}, {transform_indices = @transform_1, window_bounds = array<i64: 16, 128>}]} {
    %c0 = arith.constant 0 : index
    %c0_0 = arith.constant 0 : index
    %0 = vector.load %arg1[%c0, %c0_0] : memref<16x128xf32, #tpu.memory_space<vmem>>, vector<16x128xf32>
    %cst = arith.constant 1.000000e-01 : f32
    %1 = vector.broadcast %cst : f32 to vector<16x128xf32>
    %2 = arith.mulf %0, %1 : vector<16x128xf32>
    %3 = arith.maximumf %0, %2 : vector<16x128xf32>
    %c0_1 = arith.constant 0 : index
    %c0_2 = arith.constant 0 : index
    %4 = vector.load %arg2[%c0_1, %c0_2] : memref<16x128xf32, #tpu.memory_space<vmem>>, vector<16x128xf32>
    tpu.vector_store %arg2[%c0_1, %c0_2], %3 {strides = array<i32>} : memref<16x128xf32, #tpu.memory_space<vmem>>, vector<16x128xf32>,
    return
  }
  func.func @transform_0(%arg0: i32) -> (i32, i32) {
    %c0_i32 = arith.constant 0 : i32
    %c0_i32_0 = arith.constant 0 : i32
    return %arg0, %c0_i32 : i32, i32
  }
  func.func @transform_1(%arg0: i32) -> (i32, i32) {
    %c0_i32 = arith.constant 0 : i32
    %c0_i32_0 = arith.constant 0 : i32
    return %arg0, %c0_i32 : i32, i32
  }
}

</mosaic_0001>

<llo_original>
// kernel: tpu_custom_call.1
$region0: #{tpu_custom_call.1}
  #allocation0 [shape = 'u32[]', space=smem, size = 0x4, offset = 0x4, fixed_abs, tag = 'smem constant byte address 0x4 - core index']
  #allocation1 [shape = 'u32[144,128]{1,0:T(1,128)}', space=vmem, size = 0x12000, scoped, tag = 'internal scratch']
  %s0 = inlined_call_operand.hbm [shape: f32[16,128], index: 0, kind: input, shape index: {}]
  %s1 = inlined_call_operand.hbm [shape: f32[16,128], index: 1, kind: output, shape index: {}]
  %s2 = sld [smem:[#allocation0]]
  $region18: #{tpu_custom_call.1} parent=0
    _
  %s4 = ssub.s32 1, %s2
  %s5 = scalar_select 0, %s4, %s2
  $region1: #{tpu_custom_call.1} parent=0
    #allocation2 [shape = 'u8[8192]{0}', space=vmem, size = 0x2000, scoped, tag = 'input window, operand 0, single buffered']
    #allocation3 [shape = 's32[1]{0}', space=sflag, size = 0x4, scoped, tag = 'scoped memory for tpu_custom_call.1']
    #allocation4 [shape = 's32[1]{0}', space=sflag, size = 0x4, scoped, tag = 'scoped memory for tpu_custom_call.1']
    #allocation5 [shape = 'u8[8192]{0}', space=vmem, size = 0x2000, scoped, tag = 'output window, operand 0, single buffered']
    %6 = vsyncpa [#allocation3], 0
    %7 = vsyncpa [#allocation4], 0
    // Predicated region
    $region2: #{tpu_custom_call.1} parent=1 // pred_check
      _
    $region3: #{tpu_custom_call.1} parent=1 // pred_check_branch
      %9 = sbr.rel (0) target = $region5
    $region4: #{tpu_custom_call.1} parent=1 // pred_region
      %s11 = ssub.s32 256, 256
      %12 = vsyncadd [#allocation3], %s11
      %s13 = sshll.u32 [#allocation2], 4
      %s14 = int_to_ptr.vmem [resolvable:$true] %s13
      %19 = dma.hbm_to_vmem [thread:$0]  %s0, 256, %s14, [#allocation3], 128, 128, 8
    $region5: #{tpu_custom_call.1} parent=1 // pred_fallthru
      _
    // Predicated region
    $region6: #{tpu_custom_call.1} parent=1 // pred_check
      _
    $region7: #{tpu_custom_call.1} parent=1 // pred_check_branch
      %21 = sbr.rel (0) target = $region9
    $region8: #{tpu_custom_call.1} parent=1 // pred_region
      %22 = dma.done [#allocation3], 256
    $region9: #{tpu_custom_call.1} parent=1 // pred_fallthru
      _
    %v23 = vld [vmem:[#allocation2] sm:$0xff]
    %v24 = vld [vmem:[#allocation2 + $0x8] sm:$0xff]
    %v25 = vmul.f32 %v23, 0.1
    %v26 = vmul.f32 %v24, 0.1
    %v27 = vmax.f32 %v23, %v25
    %v28 = vmax.f32 %v24, %v26
    %29 = vst [vmem:[#allocation5] sm:$0xff] %v27
    %30 = vst [vmem:[#allocation5 + $0x8] sm:$0xff] %v28
    // Predicated region
    $region10: #{tpu_custom_call.1} parent=1 // pred_check
      _
    $region11: #{tpu_custom_call.1} parent=1 // pred_check_branch
      %32 = sbr.rel (0) target = $region13
    $region12: #{tpu_custom_call.1} parent=1 // pred_region
      %s34 = ssub.s32 256, 256
      %35 = vsyncadd [#allocation4], %s34
      %s36 = sshll.u32 [#allocation5], 4
      %s37 = int_to_ptr.vmem [resolvable:$true] %s36
      %42 = dma.vmem_to_hbm [thread:$0]  %s37, 256, %s1, [#allocation4], 128, 128, 8
    $region13: #{tpu_custom_call.1} parent=1 // pred_fallthru
      _
    // Predicated region
    $region14: #{tpu_custom_call.1} parent=1 // pred_check
      _
    $region15: #{tpu_custom_call.1} parent=1 // pred_check_branch
      %44 = sbr.rel (0) target = $region17
    $region16: #{tpu_custom_call.1} parent=1 // pred_region
      %45 = dma.done [#allocation4], 256
    $region17: #{tpu_custom_call.1} parent=1 // pred_fallthru
      _
    %46 = vsyncpa [#allocation3], 1
    %47 = vsyncpa [#allocation4], 1

</llo_original>
